<compile_context>
chip_gen: v7x
topology: tpu7x:2x2x1
jax: 0.10.0
libtpu: 0.0.40
codegen_flags: <defaults>
</compile_context>

<pallas_src>
import functools

import jax
import jax.numpy as jnp
from jax.experimental import pallas as pl
from jax.experimental.pallas import tpu as pltpu

IN_FEATURES = 4
HIDDEN = 10
OUT_FEATURES = 2


def mlp_kernel(x_ref, w1_ref, b1_ref, w2_ref, b2_ref, o_ref):
    """One batch tile: x_ref (IN, TB) -> o_ref (OUT, TB), batch on lanes."""
    x = x_ref[...]                       # (IN, TB)  float32, lane-dense
    w1 = w1_ref[...]                     # (HID, IN)  (PyTorch layout: out, in)
    w2 = w2_ref[...]                     # (OUT, HID)
    hid, n_in = w1.shape
    n_out = w2.shape[0]
    tb = x.shape[-1]

    # Layer 1: h = relu(W1 @ x + b1) as n_in broadcast FMAs on the VPU.
    # Bias broadcast is done once (hoisted) and accumulated into.
    h = jnp.broadcast_to(b1_ref[...], (hid, tb))            # (HID, TB)
    for k in range(n_in):                                    # static unroll (4)
        h = h + w1[:, k:k + 1] * x[k:k + 1, :]
    h = jnp.maximum(h, 0.0)

    # Layer 2: y = sigmoid(W2 @ h + b2) as hid broadcast FMAs.
    y = jnp.broadcast_to(b2_ref[...], (n_out, tb))           # (OUT, TB)
    for j in range(hid):                                     # static unroll (10)
        y = y + w2[:, j:j + 1] * h[j:j + 1, :]

    o_ref[...] = jax.nn.sigmoid(y).astype(o_ref.dtype)       # exp -> EUP slot


def _round_up(n, m):
    return pl.cdiv(n, m) * m


@functools.partial(jax.jit, static_argnames=("batch_tile",))
def simple_nn_forward(x, w1, b1, w2, b2, *, batch_tile=1024):
    """Forward pass of SimpleNN.

    x : (B, 4) float32
    w1: (10, 4), b1: (10,)   -- PyTorch nn.Linear layout (out_features, in_features)
    w2: (2, 10), b2: (2,)
    returns (B, 2) float32
    """
    B = x.shape[0]

    # Batch tile: multiple of 128 lanes; capped so tiny batches use one step.
    # At 1024 lanes the per-tile working set (x + h + y accumulators) stays in
    # vregs with no spills, and tiles are a few KB -> far under the 16/32 MiB
    # scoped-VMEM default on every generation (v5e/v6e/v7x).
    tb = min(batch_tile, _round_up(B, 128))
    b_padded = _round_up(B, tb)
    n_tiles = b_padded // tb

    # Layout plumbing in the wrapper: batch -> lane axis, zero-pad tail tile.
    xt = jnp.pad(x.astype(jnp.float32).T, ((0, 0), (0, b_padded - B)))  # (IN, Bp)
    b1c = b1.reshape(HIDDEN, 1).astype(jnp.float32)
    b2c = b2.reshape(OUT_FEATURES, 1).astype(jnp.float32)

    out_t = pl.pallas_call(
        mlp_kernel,
        out_shape=jax.ShapeDtypeStruct((OUT_FEATURES, b_padded), jnp.float32),
        grid=(n_tiles,),
        in_specs=[
            pl.BlockSpec((IN_FEATURES, tb), lambda i: (0, i)),       # x tile (pipelined)
            pl.BlockSpec((HIDDEN, IN_FEATURES), lambda i: (0, 0)),   # VMEM-resident
            pl.BlockSpec((HIDDEN, 1), lambda i: (0, 0)),             # VMEM-resident
            pl.BlockSpec((OUT_FEATURES, HIDDEN), lambda i: (0, 0)),  # VMEM-resident
            pl.BlockSpec((OUT_FEATURES, 1), lambda i: (0, 0)),       # VMEM-resident
        ],
        out_specs=pl.BlockSpec((OUT_FEATURES, tb), lambda i: (0, i)),
        compiler_params=pltpu.CompilerParams(
            dimension_semantics=("parallel",),   # shard batch tiles across v7x's 2 TCs
        ),
    )(xt, w1.astype(jnp.float32), b1c, w2.astype(jnp.float32), b2c)

    return out_t[:, :B].T                                            # back to (B, OUT)


def reference_forward(x, w1, b1, w2, b2):
    h = jnp.maximum(x @ w1.T + b1, 0.0)
    return jax.nn.sigmoid(h @ w2.T + b2)


if __name__ == "__main__":
    key = jax.random.PRNGKey(0)
    k_x, k_w1, k_b1, k_w2, k_b2 = jax.random.split(key, 5)

    batch = 8

    # Deterministic parameter init (mimics PyTorch's uniform fan-in init),
    # stored in PyTorch nn.Linear layout: weight (out, in), bias (out,).
    bound1 = 1.0 / (IN_FEATURES ** 0.5)
    bound2 = 1.0 / (HIDDEN ** 0.5)
    w1 = jax.random.uniform(k_w1, (HIDDEN, IN_FEATURES), jnp.float32, -bound1, bound1)
    b1 = jax.random.uniform(k_b1, (HIDDEN,), jnp.float32, -bound1, bound1)
    w2 = jax.random.uniform(k_w2, (OUT_FEATURES, HIDDEN), jnp.float32, -bound2, bound2)
    b2 = jax.random.uniform(k_b2, (OUT_FEATURES,), jnp.float32, -bound2, bound2)

    x = jax.random.normal(k_x, (batch, IN_FEATURES), jnp.float32)

    out = simple_nn_forward(x, w1, b1, w2, b2)
    jax.block_until_ready(out)

    ref = reference_forward(x, w1, b1, w2, b2)
    assert out.shape == (batch, OUT_FEATURES)
    assert jnp.allclose(out, ref, atol=1e-5, rtol=1e-5)

    print("KERNEL_OK")
</pallas_src>

<mosaic_0001>
module attributes {stable_mosaic.version = 11 : i64} {
  func.func @mlp_kernel(%arg0: i32, %arg1: memref<4x128xf32, #tpu.memory_space<vmem>>, %arg2: memref<10x4xf32, #tpu.memory_space<vmem>>, %arg3: memref<10x1xf32, #tpu.memory_space<vmem>>, %arg4: memref<2x10xf32, #tpu.memory_space<vmem>>, %arg5: memref<2x1xf32, #tpu.memory_space<vmem>>, %arg6: memref<2x128xf32, #tpu.memory_space<vmem>>) attributes {dimension_semantics = [#tpu.dimension_semantics<parallel>], iteration_bounds = array<i64: 1>, scalar_prefetch = 0 : i64, scratch_operands = 0 : i64, tpu.core_type = #tpu.core_type<tc>, window_params = [{transform_indices = @transform_0, window_bounds = array<i64: 4, 128>}, {pipeline_mode = #tpu.pipeline_mode<synchronous>, transform_indices = @transform_1, window_bounds = array<i64: 10, 4>}, {pipeline_mode = #tpu.pipeline_mode<synchronous>, transform_indices = @transform_2, window_bounds = array<i64: 10, 1>}, {pipeline_mode = #tpu.pipeline_mode<synchronous>, transform_indices = @transform_3, window_bounds = array<i64: 2, 10>}, {pipeline_mode = #tpu.pipeline_mode<synchronous>, transform_indices = @transform_4, window_bounds = array<i64: 2, 1>}, {transform_indices = @transform_5, window_bounds = array<i64: 2, 128>}]} {
    %c0 = arith.constant 0 : index
    %c0_0 = arith.constant 0 : index
    %0 = vector.load %arg1[%c0, %c0_0] : memref<4x128xf32, #tpu.memory_space<vmem>>, vector<4x128xf32>
    %c0_1 = arith.constant 0 : index
    %c0_2 = arith.constant 0 : index
    %1 = vector.load %arg2[%c0_1, %c0_2] : memref<10x4xf32, #tpu.memory_space<vmem>>, vector<10x4xf32>
    %c0_3 = arith.constant 0 : index
    %c0_4 = arith.constant 0 : index
    %2 = vector.load %arg4[%c0_3, %c0_4] : memref<2x10xf32, #tpu.memory_space<vmem>>, vector<2x10xf32>
    %c0_5 = arith.constant 0 : index
    %c0_6 = arith.constant 0 : index
    %3 = vector.load %arg3[%c0_5, %c0_6] : memref<10x1xf32, #tpu.memory_space<vmem>>, vector<10x1xf32>
    %4 = vector.shape_cast %3 : vector<10x1xf32> to vector<10x1xf32>
    %5 = vector.broadcast %4 : vector<10x1xf32> to vector<10x128xf32>
    %6 = vector.extract_strided_slice %1 {offsets = [0, 0], sizes = [10, 1], strides = [1, 1]} : vector<10x4xf32> to vector<10x1xf32>
    %7 = vector.extract_strided_slice %0 {offsets = [0, 0], sizes = [1, 128], strides = [1, 1]} : vector<4x128xf32> to vector<1x128xf32>
    %8 = vector.broadcast %6 : vector<10x1xf32> to vector<10x128xf32>
    %9 = vector.broadcast %7 : vector<1x128xf32> to vector<10x128xf32>
    %10 = arith.mulf %8, %9 : vector<10x128xf32>
    %11 = arith.addf %5, %10 : vector<10x128xf32>
    %12 = vector.extract_strided_slice %1 {offsets = [0, 1], sizes = [10, 1], strides = [1, 1]} : vector<10x4xf32> to vector<10x1xf32>
    %13 = vector.extract_strided_slice %0 {offsets = [1, 0], sizes = [1, 128], strides = [1, 1]} : vector<4x128xf32> to vector<1x128xf32>
    %14 = vector.broadcast %12 : vector<10x1xf32> to vector<10x128xf32>
    %15 = vector.broadcast %13 : vector<1x128xf32> to vector<10x128xf32>
    %16 = arith.mulf %14, %15 : vector<10x128xf32>
    %17 = arith.addf %11, %16 : vector<10x128xf32>
    %18 = vector.extract_strided_slice %1 {offsets = [0, 2], sizes = [10, 1], strides = [1, 1]} : vector<10x4xf32> to vector<10x1xf32>
    %19 = vector.extract_strided_slice %0 {offsets = [2, 0], sizes = [1, 128], strides = [1, 1]} : vector<4x128xf32> to vector<1x128xf32>
    %20 = vector.broadcast %18 : vector<10x1xf32> to vector<10x128xf32>
    %21 = vector.broadcast %19 : vector<1x128xf32> to vector<10x128xf32>
    %22 = arith.mulf %20, %21 : vector<10x128xf32>
    %23 = arith.addf %17, %22 : vector<10x128xf32>
    %24 = vector.extract_strided_slice %1 {offsets = [0, 3], sizes = [10, 1], strides = [1, 1]} : vector<10x4xf32> to vector<10x1xf32>
    %25 = vector.extract_strided_slice %0 {offsets = [3, 0], sizes = [1, 128], strides = [1, 1]} : vector<4x128xf32> to vector<1x128xf32>
    %26 = vector.broadcast %24 : vector<10x1xf32> to vector<10x128xf32>
    %27 = vector.broadcast %25 : vector<1x128xf32> to vector<10x128xf32>
    %28 = arith.mulf %26, %27 : vector<10x128xf32>
    %29 = arith.addf %23, %28 : vector<10x128xf32>
    %cst = arith.constant 0.000000e+00 : f32
    %30 = vector.broadcast %cst : f32 to vector<10x128xf32>
    %31 = arith.maximumf %29, %30 : vector<10x128xf32>
    %c0_7 = arith.constant 0 : index
    %c0_8 = arith.constant 0 : index
    %32 = vector.load %arg5[%c0_7, %c0_8] : memref<2x1xf32, #tpu.memory_space<vmem>>, vector<2x1xf32>
    %33 = vector.shape_cast %32 : vector<2x1xf32> to vector<2x1xf32>
    %34 = vector.broadcast %33 : vector<2x1xf32> to vector<2x128xf32>
    %35 = vector.extract_strided_slice %2 {offsets = [0, 0], sizes = [2, 1], strides = [1, 1]} : vector<2x10xf32> to vector<2x1xf32>
    %36 = vector.extract_strided_slice %31 {offsets = [0, 0], sizes = [1, 128], strides = [1, 1]} : vector<10x128xf32> to vector<1x128xf32>
    %37 = vector.broadcast %35 : vector<2x1xf32> to vector<2x128xf32>
    %38 = vector.broadcast %36 : vector<1x128xf32> to vector<2x128xf32>
    %39 = arith.mulf %37, %38 : vector<2x128xf32>
    %40 = arith.addf %34, %39 : vector<2x128xf32>
    %41 = vector.extract_strided_slice %2 {offsets = [0, 1], sizes = [2, 1], strides = [1, 1]} : vector<2x10xf32> to vector<2x1xf32>
    %42 = vector.extract_strided_slice %31 {offsets = [1, 0], sizes = [1, 128], strides = [1, 1]} : vector<10x128xf32> to vector<1x128xf32>
    %43 = vector.broadcast %41 : vector<2x1xf32> to vector<2x128xf32>
    %44 = vector.broadcast %42 : vector<1x128xf32> to vector<2x128xf32>
    %45 = arith.mulf %43, %44 : vector<2x128xf32>
    %46 = arith.addf %40, %45 : vector<2x128xf32>
    %47 = vector.extract_strided_slice %2 {offsets = [0, 2], sizes = [2, 1], strides = [1, 1]} : vector<2x10xf32> to vector<2x1xf32>
    %48 = vector.extract_strided_slice %31 {offsets = [2, 0], sizes = [1, 128], strides = [1, 1]} : vector<10x128xf32> to vector<1x128xf32>
    %49 = vector.broadcast %47 : vector<2x1xf32> to vector<2x128xf32>
    %50 = vector.broadcast %48 : vector<1x128xf32> to vector<2x128xf32>
    %51 = arith.mulf %49, %50 : vector<2x128xf32>
    %52 = arith.addf %46, %51 : vector<2x128xf32>
    %53 = vector.extract_strided_slice %2 {offsets = [0, 3], sizes = [2, 1], strides = [1, 1]} : vector<2x10xf32> to vector<2x1xf32>
    %54 = vector.extract_strided_slice %31 {offsets = [3, 0], sizes = [1, 128], strides = [1, 1]} : vector<10x128xf32> to vector<1x128xf32>
    %55 = vector.broadcast %53 : vector<2x1xf32> to vector<2x128xf32>
    %56 = vector.broadcast %54 : vector<1x128xf32> to vector<2x128xf32>
    %57 = arith.mulf %55, %56 : vector<2x128xf32>
    %58 = arith.addf %52, %57 : vector<2x128xf32>
    %59 = vector.extract_strided_slice %2 {offsets = [0, 4], sizes = [2, 1], strides = [1, 1]} : vector<2x10xf32> to vector<2x1xf32>
    %60 = vector.extract_strided_slice %31 {offsets = [4, 0], sizes = [1, 128], strides = [1, 1]} : vector<10x128xf32> to vector<1x128xf32>
    %61 = vector.broadcast %59 : vector<2x1xf32> to vector<2x128xf32>
    %62 = vector.broadcast %60 : vector<1x128xf32> to vector<2x128xf32>
    %63 = arith.mulf %61, %62 : vector<2x128xf32>
    %64 = arith.addf %58, %63 : vector<2x128xf32>
    %65 = vector.extract_strided_slice %2 {offsets = [0, 5], sizes = [2, 1], strides = [1, 1]} : vector<2x10xf32> to vector<2x1xf32>
    %66 = vector.extract_strided_slice %31 {offsets = [5, 0], sizes = [1, 128], strides = [1, 1]} : vector<10x128xf32> to vector<1x128xf32>
    %67 = vector.broadcast %65 : vector<2x1xf32> to vector<2x128xf32>
    %68 = vector.broadcast %66 : vector<1x128xf32> to vector<2x128xf32>
    %69 = arith.mulf %67, %68 : vector<2x128xf32>
    %70 = arith.addf %64, %69 : vector<2x128xf32>
    %71 = vector.extract_strided_slice %2 {offsets = [0, 6], sizes = [2, 1], strides = [1, 1]} : vector<2x10xf32> to vector<2x1xf32>
    %72 = vector.extract_strided_slice %31 {offsets = [6, 0], sizes = [1, 128], strides = [1, 1]} : vector<10x128xf32> to vector<1x128xf32>
    %73 = vector.broadcast %71 : vector<2x1xf32> to vector<2x128xf32>
    %74 = vector.broadcast %72 : vector<1x128xf32> to vector<2x128xf32>
    %75 = arith.mulf %73, %74 : vector<2x128xf32>
    %76 = arith.addf %70, %75 : vector<2x128xf32>
    %77 = vector.extract_strided_slice %2 {offsets = [0, 7], sizes = [2, 1], strides = [1, 1]} : vector<2x10xf32> to vector<2x1xf32>
    %78 = vector.extract_strided_slice %31 {offsets = [7, 0], sizes = [1, 128], strides = [1, 1]} : vector<10x128xf32> to vector<1x128xf32>
    %79 = vector.broadcast %77 : vector<2x1xf32> to vector<2x128xf32>
    %80 = vector.broadcast %78 : vector<1x128xf32> to vector<2x128xf32>
    %81 = arith.mulf %79, %80 : vector<2x128xf32>
    %82 = arith.addf %76, %81 : vector<2x128xf32>
    %83 = vector.extract_strided_slice %2 {offsets = [0, 8], sizes = [2, 1], strides = [1, 1]} : vector<2x10xf32> to vector<2x1xf32>
    %84 = vector.extract_strided_slice %31 {offsets = [8, 0], sizes = [1, 128], strides = [1, 1]} : vector<10x128xf32> to vector<1x128xf32>
    %85 = vector.broadcast %83 : vector<2x1xf32> to vector<2x128xf32>
    %86 = vector.broadcast %84 : vector<1x128xf32> to vector<2x128xf32>
    %87 = arith.mulf %85, %86 : vector<2x128xf32>
    %88 = arith.addf %82, %87 : vector<2x128xf32>
    %89 = vector.extract_strided_slice %2 {offsets = [0, 9], sizes = [2, 1], strides = [1, 1]} : vector<2x10xf32> to vector<2x1xf32>
    %90 = vector.extract_strided_slice %31 {offsets = [9, 0], sizes = [1, 128], strides = [1, 1]} : vector<10x128xf32> to vector<1x128xf32>
    %91 = vector.broadcast %89 : vector<2x1xf32> to vector<2x128xf32>
    %92 = vector.broadcast %90 : vector<1x128xf32> to vector<2x128xf32>
    %93 = arith.mulf %91, %92 : vector<2x128xf32>
    %94 = arith.addf %88, %93 : vector<2x128xf32>
    %95 = arith.negf %94 : vector<2x128xf32>
    %96 = math.exp %95 : vector<2x128xf32>
    %cst_9 = arith.constant 1.000000e+00 : f32
    %97 = vector.broadcast %cst_9 : f32 to vector<2x128xf32>
    %98 = arith.addf %97, %96 : vector<2x128xf32>
    %99 = arith.divf %97, %98 : vector<2x128xf32>
    %c0_10 = arith.constant 0 : index
    %c0_11 = arith.constant 0 : index
    %100 = vector.load %arg6[%c0_10, %c0_11] : memref<2x128xf32, #tpu.memory_space<vmem>>, vector<2x128xf32>
    tpu.vector_store %arg6[%c0_10, %c0_11], %99 {strides = array<i32>} : memref<2x128xf32, #tpu.memory_space<vmem>>, vector<2x128xf32>,
    return
  }
  func.func @transform_0(%arg0: i32) -> (i32, i32) {
    %c0_i32 = arith.constant 0 : i32
    %c0_i32_0 = arith.constant 0 : i32
    return %c0_i32, %arg0 : i32, i32
  }
  func.func @transform_1(%arg0: i32) -> (i32, i32) {
    %c0_i32 = arith.constant 0 : i32
    %c0_i32_0 = arith.constant 0 : i32
    %c0_i32_1 = arith.constant 0 : i32
    return %c0_i32, %c0_i32_0 : i32, i32
  }
  func.func @transform_2(%arg0: i32) -> (i32, i32) {
    %c0_i32 = arith.constant 0 : i32
    %c0_i32_0 = arith.constant 0 : i32
    %c0_i32_1 = arith.constant 0 : i32
    return %c0_i32, %c0_i32_0 : i32, i32
  }
  func.func @transform_3(%arg0: i32) -> (i32, i32) {
    %c0_i32 = arith.constant 0 : i32
    %c0_i32_0 = arith.constant 0 : i32
    %c0_i32_1 = arith.constant 0 : i32
    return %c0_i32, %c0_i32_0 : i32, i32
  }
  func.func @transform_4(%arg0: i32) -> (i32, i32) {
    %c0_i32 = arith.constant 0 : i32
    %c0_i32_0 = arith.constant 0 : i32
    %c0_i32_1 = arith.constant 0 : i32
    return %c0_i32, %c0_i32_0 : i32, i32
  }
  func.func @transform_5(%arg0: i32) -> (i32, i32) {
    %c0_i32 = arith.constant 0 : i32
    %c0_i32_0 = arith.constant 0 : i32
    return %c0_i32, %arg0 : i32, i32
  }
}

</mosaic_0001>

<llo_original>
// kernel: simple_nn_forward.1
$region0: #{simple_nn_forward.1}
  #allocation0 [shape = 'u32[]', space=smem, size = 0x4, offset = 0x4, fixed_abs, tag = 'smem constant byte address 0x4 - core index']
  #allocation1 [shape = 'u32[144,128]{1,0:T(1,128)}', space=vmem, size = 0x12000, scoped, tag = 'internal scratch']
  %s0 = inlined_call_operand.vmem [shape: f32[4,128], index: 0, kind: input, shape index: {}]
  %s1 = inlined_call_operand.vmem [shape: f32[10,4], index: 1, kind: input, shape index: {}]
  %s2 = inlined_call_operand.vmem [shape: f32[10,1], index: 2, kind: input, shape index: {}]
  %s3 = inlined_call_operand.vmem [shape: f32[2,10], index: 3, kind: input, shape index: {}]
  %s4 = inlined_call_operand.vmem [shape: f32[2,1], index: 4, kind: input, shape index: {}]
  %s5 = inlined_call_operand.vmem [shape: f32[2,128], index: 5, kind: output, shape index: {}]
  %s6 = sld [smem:[#allocation0]]
  $region30: #{simple_nn_forward.1} parent=0
    _
  %s8 = ssub.s32 1, %s6
  %s9 = scalar_select 0, %s8, %s6
  // Predicated region
  $region2: #{simple_nn_forward.1} parent=0 // pred_check
    _
  $region3: #{simple_nn_forward.1} parent=0 // pred_check_branch
    %11 = sbr.rel (0) target = $region5
  $region4: #{simple_nn_forward.1} parent=0 // pred_region
    _
  $region5: #{simple_nn_forward.1} parent=0 // pred_fallthru
    _
  // Predicated region
  $region6: #{simple_nn_forward.1} parent=0 // pred_check
    _
  $region7: #{simple_nn_forward.1} parent=0 // pred_check_branch
    %13 = sbr.rel (0) target = $region9
  $region8: #{simple_nn_forward.1} parent=0 // pred_region
    _
  $region9: #{simple_nn_forward.1} parent=0 // pred_fallthru
    _
  // Predicated region
  $region10: #{simple_nn_forward.1} parent=0 // pred_check
    _
  $region11: #{simple_nn_forward.1} parent=0 // pred_check_branch
    %15 = sbr.rel (0) target = $region13
  $region12: #{simple_nn_forward.1} parent=0 // pred_region
    _
  $region13: #{simple_nn_forward.1} parent=0 // pred_fallthru
    _
  // Predicated region
  $region14: #{simple_nn_forward.1} parent=0 // pred_check
    _
  $region15: #{simple_nn_forward.1} parent=0 // pred_check_branch
    %17 = sbr.rel (0) target = $region17
  $region16: #{simple_nn_forward.1} parent=0 // pred_region
    _
  $region17: #{simple_nn_forward.1} parent=0 // pred_fallthru
    _
  // Predicated region
  $region18: #{simple_nn_forward.1} parent=0 // pred_check
    _
  $region19: #{simple_nn_forward.1} parent=0 // pred_check_branch
    %19 = sbr.rel (0) target = $region21
  $region20: #{simple_nn_forward.1} parent=0 // pred_region
    _
  $region21: #{simple_nn_forward.1} parent=0 // pred_fallthru
    _
  %v20 = vld [vmem:[%s0] sm:$0xf]
  %v21 = vld [vmem:[%s1] sm:$0xff]
  %v22 = vld [vmem:[%s1 + $0x8] sm:$0x3]
  %v23 = vld [vmem:[%s3] sm:$0x3]
  %v24 = vld [vmem:[%s2] sm:$0xff]
  %v25 = vld [vmem:[%s2 + $0x8] sm:$0x3]
  %27 = vset.pattern.permute.xlu0 0
  %28 = vperm.xlu0 %27, %v24
  %v29 = vpop.permute.xlu0 %28
  %32 = vset.pattern.permute.xlu0 0
  %33 = vperm.xlu0 %32, %v25
  %v34 = vpop.permute.xlu0 %33
  %37 = vset.pattern.permute.xlu0 0
  %38 = vperm.xlu0 %37, %v21
  %v39 = vpop.permute.xlu0 %38
  %42 = vset.pattern.permute.xlu0 0
  %43 = vperm.xlu0 %42, %v22
  %v44 = vpop.permute.xlu0 %43
  %v46 = vlaneseq
  %v47 = vshrl.u32 %v46, 7
  %v48 = vsub.s32 0, %v47
  %v49 = vrot.slane %v20, %v48
  %v50 = vmul.f32 %v39, %v49
  %v51 = vmul.f32 %v44, %v49
  %v52 = vadd.f32 %v29, %v50
  %v53 = vadd.f32 %v34, %v51
  %54 = vset.pattern.permute.xlu0 1
  %55 = vperm.xlu0 %54, %v21
  %v56 = vpop.permute.xlu0 %55
  %58 = vset.pattern.permute.xlu0 1
  %59 = vperm.xlu0 %58, %v22
  %v60 = vpop.permute.xlu0 %59
  %v62 = vlaneseq
  %v63 = vshrl.u32 %v62, 7
  %v64 = vsub.s32 1, %v63
  %v65 = vrot.slane %v20, %v64
  %v66 = vmul.f32 %v56, %v65
  %v67 = vmul.f32 %v60, %v65
  %v68 = vadd.f32 %v52, %v66
  %v69 = vadd.f32 %v53, %v67
  %70 = vset.pattern.permute.xlu0 2
  %71 = vperm.xlu0 %70, %v21
  %v72 = vpop.permute.xlu0 %71
  %74 = vset.pattern.permute.xlu0 2
  %75 = vperm.xlu0 %74, %v22
  %v76 = vpop.permute.xlu0 %75
  %v78 = vlaneseq
  %v79 = vshrl.u32 %v78, 7
  %v80 = vsub.s32 2, %v79
  %v81 = vrot.slane %v20, %v80
  %v82 = vmul.f32 %v72, %v81
  %v83 = vmul.f32 %v76, %v81
  %v84 = vadd.f32 %v68, %v82
  %v85 = vadd.f32 %v69, %v83
  %86 = vset.pattern.permute.xlu0 3
  %87 = vperm.xlu0 %86, %v21
  %v88 = vpop.permute.xlu0 %87
  %90 = vset.pattern.permute.xlu0 3
  %91 = vperm.xlu0 %90, %v22
  %v92 = vpop.permute.xlu0 %91
  %v94 = vlaneseq
  %v95 = vshrl.u32 %v94, 7
  %v96 = vsub.s32 3, %v95
  %v97 = vrot.slane %v20, %v96
  %v98 = vmul.f32 %v88, %v97
  %v99 = vmul.f32 %v92, %v97
  %v100 = vadd.f32 %v84, %v98
  %v101 = vadd.f32 %v85, %v99
  %v102 = vmax.f32 %v100, 0.0
  %v103 = vmax.f32 %v101, 0.0
  %v104 = vld [vmem:[%s4] sm:$0x3]
  %106 = vset.pattern.permute.xlu0 0
  %107 = vperm.xlu0 %106, %v104
  %v108 = vpop.permute.xlu0 %107
  %111 = vset.pattern.permute.xlu0 0
  %112 = vperm.xlu0 %111, %v23
  %v113 = vpop.permute.xlu0 %112
  %v115 = vlaneseq
  %v116 = vshrl.u32 %v115, 7
  %v117 = vsub.s32 0, %v116
  %v118 = vrot.slane %v102, %v117
  %v119 = vmul.f32 %v113, %v118
  %v120 = vadd.f32 %v108, %v119
  %121 = vset.pattern.permute.xlu0 1
  %122 = vperm.xlu0 %121, %v23
  %v123 = vpop.permute.xlu0 %122
  %v125 = vlaneseq
  %v126 = vshrl.u32 %v125, 7
  %v127 = vsub.s32 1, %v126
  %v128 = vrot.slane %v102, %v127
  %v129 = vmul.f32 %v123, %v128
  %v130 = vadd.f32 %v120, %v129
  %131 = vset.pattern.permute.xlu0 2
  %132 = vperm.xlu0 %131, %v23
  %v133 = vpop.permute.xlu0 %132
  %v135 = vlaneseq
  %v136 = vshrl.u32 %v135, 7
  %v137 = vsub.s32 2, %v136
  %v138 = vrot.slane %v102, %v137
  %v139 = vmul.f32 %v133, %v138
  %v140 = vadd.f32 %v130, %v139
  %141 = vset.pattern.permute.xlu0 3
  %142 = vperm.xlu0 %141, %v23
  %v143 = vpop.permute.xlu0 %142
  %v145 = vlaneseq
  %v146 = vshrl.u32 %v145, 7
  %v147 = vsub.s32 3, %v146
  %v148 = vrot.slane %v102, %v147
  %v149 = vmul.f32 %v143, %v148
  %v150 = vadd.f32 %v140, %v149
  %151 = vset.pattern.permute.xlu0 4
  %152 = vperm.xlu0 %151, %v23
  %v153 = vpop.permute.xlu0 %152
  %v155 = vlaneseq
  %v156 = vshrl.u32 %v155, 7
  %v157 = vsub.s32 4, %v156
  %v158 = vrot.slane %v102, %v157
  %v159 = vmul.f32 %v153, %v158
  %v160 = vadd.f32 %v150, %v159
  %161 = vset.pattern.permute.xlu0 5
  %162 = vperm.xlu0 %161, %v23
  %v163 = vpop.permute.xlu0 %162
  %v165 = vlaneseq
  %v166 = vshrl.u32 %v165, 7
  %v167 = vsub.s32 5, %v166
  %v168 = vrot.slane %v102, %v167
  %v169 = vmul.f32 %v163, %v168
  %v170 = vadd.f32 %v160, %v169
  %171 = vset.pattern.permute.xlu0 6
  %172 = vperm.xlu0 %171, %v23
  %v173 = vpop.permute.xlu0 %172
  %v175 = vlaneseq
  %v176 = vshrl.u32 %v175, 7
  %v177 = vsub.s32 6, %v176
  %v178 = vrot.slane %v102, %v177
  %v179 = vmul.f32 %v173, %v178
  %v180 = vadd.f32 %v170, %v179
  %181 = vset.pattern.permute.xlu0 7
  %182 = vperm.xlu0 %181, %v23
  %v183 = vpop.permute.xlu0 %182
  %v185 = vlaneseq
  %v186 = vshrl.u32 %v185, 7
  %v187 = vsub.s32 7, %v186
  %v188 = vrot.slane %v102, %v187
  %v189 = vmul.f32 %v183, %v188
  %v190 = vadd.f32 %v180, %v189
  %191 = vset.pattern.permute.xlu0 8
  %192 = vperm.xlu0 %191, %v23
  %v193 = vpop.permute.xlu0 %192
  %v195 = vlaneseq
  %v196 = vshrl.u32 %v195, 7
  %v197 = vsub.s32 0, %v196
  %v198 = vrot.slane %v103, %v197
  %v199 = vmul.f32 %v193, %v198
  %v200 = vadd.f32 %v190, %v199
  %201 = vset.pattern.permute.xlu0 9
  %202 = vperm.xlu0 %201, %v23
  %v203 = vpop.permute.xlu0 %202
  %v205 = vlaneseq
  %v206 = vshrl.u32 %v205, 7
  %v207 = vsub.s32 1, %v206
  %v208 = vrot.slane %v103, %v207
  %v209 = vmul.f32 %v203, %v208
  %v210 = vadd.f32 %v200, %v209
  %v211 = vxor.u32 %v210, 2147483648
  %v212 = vmul.f32 %v211, 1.442695
  %v213 = vpow.pop %v212
  %v214 = vadd.f32 %v213, 1.0
  %v215 = vrcp.pop %v214
  %v216 = vmul.f32 1.0, %v215
  %217 = vst [vmem:[%s5] sm:$0x3] %v216
  // Predicated region
  $region22: #{simple_nn_forward.1} parent=0 // pred_check
    _
  $region23: #{simple_nn_forward.1} parent=0 // pred_check_branch
    %219 = sbr.rel (0) target = $region25
  $region24: #{simple_nn_forward.1} parent=0 // pred_region
    _
  $region25: #{simple_nn_forward.1} parent=0 // pred_fallthru
    _
  // Predicated region
  $region26: #{simple_nn_forward.1} parent=0 // pred_check
    _
  $region27: #{simple_nn_forward.1} parent=0 // pred_check_branch
    %221 = sbr.rel (0) target = $region29
  $region28: #{simple_nn_forward.1} parent=0 // pred_region
    _
  $region29: #{simple_nn_forward.1} parent=0 // pred_fallthru
    _

</llo_original>
